<compile_context>
chip_gen: v5e
topology: v5e:2x2
jax: 0.10.0
libtpu: 0.0.40
codegen_flags: <defaults>
</compile_context>

<pallas_src>
import jax
import jax.numpy as jnp
from jax.experimental import pallas as pl
from jax.experimental.pallas import tpu as pltpu

_LANES = 128


def _mish_kernel(x_ref, o_ref):
    xf = x_ref[...].astype(jnp.float32)
    # Rationalized mish: tanh(softplus(x)) = n / (n + 2), n = e^x (e^x + 2).
    # Clamp the exp argument so the discarded branch of the select stays
    # finite (no inf*inf -> NaN); for x > 20 we pass x through, matching the
    # threshold behaviour of F.softplus.
    ex = jnp.exp(jnp.minimum(xf, 20.0))
    num = ex * (ex + 2.0)
    t = num / (num + 2.0)
    y = jnp.where(xf > 20.0, xf, xf * t)
    o_ref[...] = y.astype(o_ref.dtype)


def _mish_jnp(x: jax.Array) -> jax.Array:
    """Same math as the kernel, for tiny arrays / the <128-element ragged tail."""
    xf = x.astype(jnp.float32)
    ex = jnp.exp(jnp.minimum(xf, 20.0))
    num = ex * (ex + 2.0)
    y = jnp.where(xf > 20.0, xf, xf * num / (num + 2.0))
    return y.astype(x.dtype)


def _min_sublanes(dtype) -> int:
    # f32 -> 8, bf16/f16 -> 16, int8/fp8 -> 32 (sublane packing).
    itemsize = jnp.dtype(dtype).itemsize
    return max(8, 32 // itemsize)


def _round_up(a: int, m: int) -> int:
    return ((a + m - 1) // m) * m


def _chip_config():
    """Per-generation tile-byte target / core count / scoped-VMEM override."""
    try:
        kind = jax.devices()[0].device_kind.lower()
    except Exception:  # pragma: no cover - defensive
        kind = ""
    if "v7" in kind:
        # 8 MiB blocks; in+out double-buffered = 32 MiB, so raise the scoped
        # limit above the 32 MiB default (physical VMEM is 64 MiB per TC).
        return {"target_bytes": 8 << 20, "num_cores": 2,
                "vmem_limit_bytes": 48 << 20}
    if "v6" in kind:
        # 4 MiB blocks fit the 32 MiB scoped default with room to spare.
        return {"target_bytes": 4 << 20, "num_cores": 1, "vmem_limit_bytes": None}
    # v5e / unknown: conservative. 2 MiB blocks -> ~8 MiB double-buffered,
    # inside v5e's 16 MiB scoped-VMEM default; its slower HBM gains nothing
    # from bigger tiles anyway.
    return {"target_bytes": 2 << 20, "num_cores": 1, "vmem_limit_bytes": None}


def _pick_tile_rows(rows: int, min_sub: int, itemsize: int,
                    target_bytes: int, num_cores: int) -> int:
    """Byte-targeted block rows; megacore-aware only on multi-TC chips."""
    row_bytes = _LANES * itemsize
    tr = max(min_sub, (target_bytes // row_bytes) // min_sub * min_sub)
    tr = min(tr, _round_up(rows, min_sub))  # no point exceeding the slab
    if num_cores > 1:
        slab_bytes = rows * row_bytes
        if slab_bytes >= 2 * num_cores * target_bytes:
            # >= 2 blocks per TensorCore so each core overlaps DMA and compute.
            cap = (rows // (2 * num_cores)) // min_sub * min_sub
            tr = max(min_sub, min(tr, cap))
        steps = pl.cdiv(rows, tr)
        if steps > 1 and steps % 2 == 1:
            # Best-effort: even step count so the two cores get equal work.
            tr = max(min_sub, min(tr, _round_up(pl.cdiv(rows, steps + 1), min_sub)))
    return tr


def _mish_2d(x2d: jax.Array, tr: int, vmem_limit_bytes) -> jax.Array:
    rows = x2d.shape[0]
    grid = (pl.cdiv(rows, tr),)
    cp_kwargs = {"dimension_semantics": ("parallel",)}
    if vmem_limit_bytes is not None:
        cp_kwargs["vmem_limit_bytes"] = vmem_limit_bytes
    return pl.pallas_call(
        _mish_kernel,
        out_shape=jax.ShapeDtypeStruct(x2d.shape, x2d.dtype),
        grid_spec=pltpu.PrefetchScalarGridSpec(
            num_scalar_prefetch=0,
            grid=grid,
            in_specs=[pl.BlockSpec((tr, _LANES), lambda i: (i, 0))],
            out_specs=pl.BlockSpec((tr, _LANES), lambda i: (i, 0)),
        ),
        compiler_params=pltpu.CompilerParams(**cp_kwargs),
    )(x2d)


def mish(x: jax.Array) -> jax.Array:
    """Elementwise mish(x) = x * tanh(softplus(x)); same shape/dtype as x."""
    orig_shape = x.shape
    n = x.size
    if n == 0:
        return x

    min_sub = _min_sublanes(x.dtype)
    itemsize = jnp.dtype(x.dtype).itemsize

    if n < min_sub * _LANES:
        # Less than one minimum tile of work: pipeline overhead dominates.
        return _mish_jnp(x)

    cfg = _chip_config()
    flat = x.reshape(-1)
    rem = n % _LANES
    n_main = n - rem
    rows = n_main // _LANES  # >= min_sub by construction

    tr = _pick_tile_rows(rows, min_sub, itemsize,
                         cfg["target_bytes"], cfg["num_cores"])
    main = _mish_2d(flat[:n_main].reshape(rows, _LANES), tr,
                    cfg["vmem_limit_bytes"])

    if rem == 0:
        # Common (NCHW activation) path: view-like reshapes only, no pad/slice.
        return main.reshape(orig_shape)

    # Ragged tail (< 128 elements): computed directly, so only the tail (not
    # the whole array) takes the non-kernel path.
    # TODO(synk): fold the tail into the kernel with a masked pltpu.store to
    # avoid the concatenate's extra output write for ragged sizes.
    tail = _mish_jnp(flat[n_main:])
    return jnp.concatenate([main.reshape(-1), tail]).reshape(orig_shape)


def mish_reference(x: jax.Array) -> jax.Array:
    xf = x.astype(jnp.float32)
    return (xf * jnp.tanh(jax.nn.softplus(xf))).astype(x.dtype)


if __name__ == "__main__":
    key = jax.random.PRNGKey(0)
    x = jax.random.normal(key, (2, 4, 16, 16), dtype=jnp.float32)

    y = mish(x)
    jax.block_until_ready(y)

    y_ref = mish_reference(x)
    assert y.shape == x.shape and y.dtype == x.dtype
    assert jnp.allclose(y, y_ref, atol=1e-5, rtol=1e-5), "mismatch vs reference"

    print("KERNEL_OK")
</pallas_src>

<mosaic_0001>
module attributes {stable_mosaic.version = 11 : i64} {
  func.func @_mish_kernel(%arg0: i32, %arg1: memref<16x128xf32, #tpu.memory_space<vmem>>, %arg2: memref<16x128xf32, #tpu.memory_space<vmem>>) attributes {dimension_semantics = [#tpu.dimension_semantics<parallel>], iteration_bounds = array<i64: 1>, scalar_prefetch = 0 : i64, scratch_operands = 0 : i64, tpu.core_type = #tpu.core_type<tc>, window_params = [{transform_indices = @transform_0, window_bounds = array<i64: 16, 128>}, {transform_indices = @transform_1, window_bounds = array<i64: 16, 128>}]} {
    %c0 = arith.constant 0 : index
    %c0_0 = arith.constant 0 : index
    %0 = vector.load %arg1[%c0, %c0_0] : memref<16x128xf32, #tpu.memory_space<vmem>>, vector<16x128xf32>
    %cst = arith.constant 2.000000e+01 : f32
    %1 = vector.broadcast %cst : f32 to vector<16x128xf32>
    %2 = arith.minimumf %0, %1 : vector<16x128xf32>
    %3 = math.exp %2 : vector<16x128xf32>
    %cst_1 = arith.constant 2.000000e+00 : f32
    %4 = vector.broadcast %cst_1 : f32 to vector<16x128xf32>
    %5 = arith.addf %3, %4 : vector<16x128xf32>
    %6 = arith.mulf %3, %5 : vector<16x128xf32>
    %cst_2 = arith.constant 2.000000e+00 : f32
    %7 = vector.broadcast %cst_2 : f32 to vector<16x128xf32>
    %8 = arith.addf %6, %7 : vector<16x128xf32>
    %9 = arith.divf %6, %8 : vector<16x128xf32>
    %cst_3 = arith.constant 2.000000e+01 : f32
    %10 = vector.broadcast %cst_3 : f32 to vector<16x128xf32>
    %11 = arith.cmpf ogt, %0, %10 : vector<16x128xf32>
    %12 = arith.mulf %0, %9 : vector<16x128xf32>
    %13 = arith.select %11, %0, %12 : vector<16x128xi1>, vector<16x128xf32>
    %c0_4 = arith.constant 0 : index
    %c0_5 = arith.constant 0 : index
    %14 = vector.load %arg2[%c0_4, %c0_5] : memref<16x128xf32, #tpu.memory_space<vmem>>, vector<16x128xf32>
    tpu.vector_store %arg2[%c0_4, %c0_5], %13 {strides = array<i32>} : memref<16x128xf32, #tpu.memory_space<vmem>>, vector<16x128xf32>,
    return
  }
  func.func @transform_0(%arg0: i32) -> (i32, i32) {
    %c0_i32 = arith.constant 0 : i32
    %c0_i32_0 = arith.constant 0 : i32
    return %arg0, %c0_i32 : i32, i32
  }
  func.func @transform_1(%arg0: i32) -> (i32, i32) {
    %c0_i32 = arith.constant 0 : i32
    %c0_i32_0 = arith.constant 0 : i32
    return %arg0, %c0_i32 : i32, i32
  }
}

</mosaic_0001>

<llo_original>
// kernel: tpu_custom_call.1
$region0: #{tpu_custom_call.1}
  #allocation0 [shape = 'u32[]', space=smem, size = 0x4, offset = 0x4, fixed_abs, tag = 'smem constant byte address 0x4 - core index']
  #allocation1 [shape = 'u32[72,128]{1,0:T(1,128)}', space=vmem, size = 0x9000, scoped, tag = 'internal scratch']
  %s0 = inlined_call_operand.hbm [shape: f32[16,128], index: 0, kind: input, shape index: {}]
  %s1 = inlined_call_operand.hbm [shape: f32[16,128], index: 1, kind: output, shape index: {}]
  %s2 = sld [smem:[#allocation0]]
  $region18: #{tpu_custom_call.1} parent=0
    _
  %s4 = ssub.s32 1, %s2
  %s5 = scalar_select 0, %s4, %s2
  $region1: #{tpu_custom_call.1} parent=0
    #allocation2 [shape = 'u8[8192]{0}', space=vmem, size = 0x2000, scoped, tag = 'input window, operand 0, single buffered']
    #allocation3 [shape = 's32[1]{0}', space=sflag, size = 0x4, scoped, tag = 'scoped memory for tpu_custom_call.1']
    #allocation4 [shape = 's32[1]{0}', space=sflag, size = 0x4, scoped, tag = 'scoped memory for tpu_custom_call.1']
    #allocation5 [shape = 'u8[8192]{0}', space=vmem, size = 0x2000, scoped, tag = 'output window, operand 0, single buffered']
    %6 = vsyncpa [#allocation3], 0
    %7 = vsyncpa [#allocation4], 0
    // Predicated region
    $region2: #{tpu_custom_call.1} parent=1 // pred_check
      _
    $region3: #{tpu_custom_call.1} parent=1 // pred_check_branch
      %9 = sbr.rel (0) target = $region5
    $region4: #{tpu_custom_call.1} parent=1 // pred_region
      %11 = vsyncadd [#allocation3], 0
      %s12 = sshll.u32 %s0, 4
      %s13 = int_to_ptr.hbm [resolvable:$true] %s12
      %s14 = sshll.u32 [#allocation2], 4
      %s15 = int_to_ptr.vmem [resolvable:$true] %s14
      %20 = dma.hbm_to_vmem [thread:$0]  %s13, 256, %s15, [#allocation3], 128, 128, 8
    $region5: #{tpu_custom_call.1} parent=1 // pred_fallthru
      _
    // Predicated region
    $region6: #{tpu_custom_call.1} parent=1 // pred_check
      _
    $region7: #{tpu_custom_call.1} parent=1 // pred_check_branch
      %22 = sbr.rel (0) target = $region9
    $region8: #{tpu_custom_call.1} parent=1 // pred_region
      %24 = dma.done [#allocation3], 256
    $region9: #{tpu_custom_call.1} parent=1 // pred_fallthru
      _
    %v25 = vld [vmem:[#allocation2] sm:$0xff]
    %v26 = vld [vmem:[#allocation2 + $0x8] sm:$0xff]
    %v27 = vmin.f32 %v25, 20.0
    %v28 = vmin.f32 %v26, 20.0
    %v29 = vmul.f32 %v27, 1.442695
    %v30 = vpow.pop %v29
    %v31 = vmul.f32 %v28, 1.442695
    %v32 = vpow.pop %v31
    %v33 = vadd.f32 %v30, 2.0
    %v34 = vadd.f32 %v32, 2.0
    %v35 = vmul.f32 %v30, %v33
    %v36 = vmul.f32 %v32, %v34
    %v37 = vadd.f32 %v35, 2.0
    %v38 = vadd.f32 %v36, 2.0
    %v39 = vrcp.pop %v37
    %v40 = vmul.f32 %v37, %v39
    %v41 = vsub.f32 1.0, %v40
    %v42 = vmul.f32 %v39, %v41
    %v43 = vadd.f32 %v39, %v42
    %vm44 = vweird.f32 %v37
    %vm45 = vweird.f32 %v39
    %vm46 = vmor %vm44, %vm45
    %v47 = vsel %vm46, %v39, %v43
    %v48 = vand.u32 2147483647, %v37
    %vm49 = vcmp.eq.f32.partialorder %v48, 8.507059e+37
    %v50 = vand.u32 %v37, 2147483648
    %v51 = vor.u32 1.1754944e-38, %v50
    %v52 = vsel %vm49, %v51, %v47
    %v53 = vmul.f32 %v35, %v52
    %v54 = vrcp.pop %v38
    %v55 = vmul.f32 %v38, %v54
    %v56 = vsub.f32 1.0, %v55
    %v57 = vmul.f32 %v54, %v56
    %v58 = vadd.f32 %v54, %v57
    %vm59 = vweird.f32 %v38
    %vm60 = vweird.f32 %v54
    %vm61 = vmor %vm59, %vm60
    %v62 = vsel %vm61, %v54, %v58
    %v63 = vand.u32 2147483647, %v38
    %vm64 = vcmp.eq.f32.partialorder %v63, 8.507059e+37
    %v65 = vand.u32 %v38, 2147483648
    %v66 = vor.u32 1.1754944e-38, %v65
    %v67 = vsel %vm64, %v66, %v62
    %v68 = vmul.f32 %v36, %v67
    %vm69 = vcmp.gt.f32.partialorder %v25, 20.0
    %vm70 = vcmp.gt.f32.partialorder %v26, 20.0
    %v71 = vmul.f32 %v25, %v53
    %v72 = vmul.f32 %v26, %v68
    %v73 = vsel %vm69, %v25, %v71
    %v74 = vsel %vm70, %v26, %v72
    %75 = vst [vmem:[#allocation5] sm:$0xff] %v73
    %76 = vst [vmem:[#allocation5 + $0x8] sm:$0xff] %v74
    // Predicated region
    $region10: #{tpu_custom_call.1} parent=1 // pred_check
      _
    $region11: #{tpu_custom_call.1} parent=1 // pred_check_branch
      %78 = sbr.rel (0) target = $region13
    $region12: #{tpu_custom_call.1} parent=1 // pred_region
      %80 = vsyncadd [#allocation4], 0
      %s81 = sshll.u32 [#allocation5], 4
      %s82 = int_to_ptr.vmem [resolvable:$true] %s81
      %s83 = sshll.u32 %s1, 4
      %s84 = int_to_ptr.hbm [resolvable:$true] %s83
      %89 = dma.vmem_to_hbm [thread:$0]  %s82, 256, %s84, [#allocation4], 128, 128, 8
    $region13: #{tpu_custom_call.1} parent=1 // pred_fallthru
      _
    // Predicated region
    $region14: #{tpu_custom_call.1} parent=1 // pred_check
      _
    $region15: #{tpu_custom_call.1} parent=1 // pred_check_branch
      %91 = sbr.rel (0) target = $region17
    $region16: #{tpu_custom_call.1} parent=1 // pred_region
      %93 = dma.done [#allocation4], 256
    $region17: #{tpu_custom_call.1} parent=1 // pred_fallthru
      _
    %94 = vsyncpa [#allocation3], 1
    %95 = vsyncpa [#allocation4], 1

</llo_original>
